<compile_context>
chip_gen: v6e
topology: v6e:2x2x1
jax: 0.10.0
libtpu: 0.0.40
codegen_flags: <defaults>
</compile_context>

<pallas_src>
import functools
import math

import jax
import jax.numpy as jnp
from jax.experimental import pallas as pl
from jax.experimental.pallas import tpu as pltpu


_VMEM_CAP = 48 * 1024 * 1024  # stay safely under v7x's 64 MiB physical VMEM


def _pick_tile(dim, pref, align):
    """Largest tile t <= pref with t % align == 0 and dim % t == 0; else the full dim."""
    if dim <= pref:
        return dim
    t = (pref // align) * align
    while t >= align:
        if dim % t == 0:
            return t
        t -= align
    return dim


def _vmem_limit(work_bytes):
    return int(min(max(2 * work_bytes, 8 * 1024 * 1024), _VMEM_CAP))


# ----------------------------- Linear kernel -------------------------------
def _linear_kernel(x_ref, w_ref, b_ref, o_ref, acc_ref, *, scale, mxu_dtype):
    @pl.when(pl.program_id(2) == 0)
    def _():
        acc_ref[...] = jnp.zeros_like(acc_ref)

    x = x_ref[...]
    w = w_ref[...]
    if mxu_dtype is not None:
        x = x.astype(mxu_dtype)
        w = w.astype(mxu_dtype)
    acc_ref[...] += jnp.dot(x, w, preferred_element_type=jnp.float32)

    @pl.when(pl.program_id(2) == pl.num_programs(2) - 1)
    def _():
        r = acc_ref[...] + b_ref[...].astype(jnp.float32)
        if scale != 1.0:
            r = r * scale
        o_ref[...] = r.astype(o_ref.dtype)


def pallas_linear(x2d, w_t, bias, *, scale=1.0, mxu_dtype=None):
    """y = (x @ w_t + bias) * scale, with w_t stored pre-transposed as (in, out)."""
    M, K = x2d.shape
    Kw, N = w_t.shape
    assert K == Kw
    tm = _pick_tile(M, 256, 8)
    tn = _pick_tile(N, 256, 128)
    tk = _pick_tile(K, 512, 128)

    isz = x2d.dtype.itemsize
    work = (2 * (tm * tk + tk * tn + tn) + 2 * tm * tn) * isz + tm * tn * 4

    kernel = functools.partial(_linear_kernel, scale=float(scale), mxu_dtype=mxu_dtype)
    return pl.pallas_call(
        kernel,
        out_shape=jax.ShapeDtypeStruct((M, N), x2d.dtype),
        grid=(M // tm, N // tn, K // tk),
        in_specs=[
            pl.BlockSpec((tm, tk), lambda i, j, k: (i, k)),
            pl.BlockSpec((tk, tn), lambda i, j, k: (k, j)),
            pl.BlockSpec((1, tn), lambda i, j, k: (0, j)),
        ],
        out_specs=pl.BlockSpec((tm, tn), lambda i, j, k: (i, j)),
        scratch_shapes=[pltpu.VMEM((tm, tn), jnp.float32)],
        compiler_params=pltpu.CompilerParams(
            dimension_semantics=("parallel", "parallel", "arbitrary"),
            vmem_limit_bytes=_vmem_limit(work)),
    )(x2d, w_t, bias.reshape(1, N))


# --------------------- Scaled-dot-product attn kernel ----------------------
def _attn_kernel(q_ref, kv_ref, cov_ref, ctx_ref, attn_ref, *, mxu_dtype):
    H = q_ref.shape[2]
    cov = cov_ref[0].astype(jnp.float32)          # (Lq, Lk); 1/sqrt(dk) already folded in
    ctx_heads = []
    for h in range(H):                            # static unroll over heads
        q = q_ref[0, :, h, :]                     # (Lq, dk)
        k = kv_ref[0, :, h, :]                    # (Lk, dk)
        v = kv_ref[0, :, H + h, :]                # (Lk, dk)
        if mxu_dtype is not None:
            q = q.astype(mxu_dtype)
            k = k.astype(mxu_dtype)
        # q @ k^T without materializing a transpose: contract the d_k axes.
        s = jax.lax.dot_general(q, k, (((1,), (1,)), ((), ())),
                                preferred_element_type=jnp.float32) + cov
        m = jnp.max(s, axis=-1, keepdims=True)
        e = jnp.exp(s - m)
        l = jnp.sum(e, axis=-1, keepdims=True)
        p = e * pl.reciprocal(l, approx=True)     # EUP reciprocal + VPU multiply
        attn_ref[0, h] = p.astype(attn_ref.dtype)
        pv_dtype = mxu_dtype if mxu_dtype is not None else v.dtype
        ctx_heads.append(jnp.dot(p.astype(pv_dtype), v.astype(pv_dtype),
                                 preferred_element_type=jnp.float32))
    # One lane-dense (Lq, H*dk) store for the whole context block.
    ctx_ref[0] = jnp.concatenate(ctx_heads, axis=-1).astype(ctx_ref.dtype)


def pallas_attention(pq, kv, cov, *, mxu_dtype=None):
    """pq: (B, Lq, H, dk); kv: (B, Lk, 2H, dk) [K heads | V heads]; cov: (B, Lq, Lk).

    Returns ctx (B, Lq, H*dk) and attn (B, H, Lq, Lk)."""
    B, Lq, H, d_k = pq.shape
    Lk = kv.shape[1]
    D = H * d_k

    isz = pq.dtype.itemsize
    work = 2 * isz * (Lq * H * d_k + Lk * 2 * H * d_k + Lq * Lk)   # double-buffered inputs
    work += 2 * isz * (Lq * D + H * Lq * Lk)                       # double-buffered outputs
    work += 4 * (3 * Lq * Lk + Lq * D)                             # f32 temporaries

    kernel = functools.partial(_attn_kernel, mxu_dtype=mxu_dtype)
    ctx, attn = pl.pallas_call(
        kernel,
        out_shape=(
            jax.ShapeDtypeStruct((B, Lq, D), pq.dtype),
            jax.ShapeDtypeStruct((B, H, Lq, Lk), pq.dtype),
        ),
        grid=(B,),
        in_specs=[
            pl.BlockSpec((1, Lq, H, d_k), lambda b: (b, 0, 0, 0)),
            pl.BlockSpec((1, Lk, 2 * H, d_k), lambda b: (b, 0, 0, 0)),
            pl.BlockSpec((1, Lq, Lk), lambda b: (b, 0, 0)),
        ],
        out_specs=(
            pl.BlockSpec((1, Lq, D), lambda b: (b, 0, 0)),
            pl.BlockSpec((1, H, Lq, Lk), lambda b: (b, 0, 0, 0)),
        ),
        compiler_params=pltpu.CompilerParams(
            dimension_semantics=("parallel",),
            vmem_limit_bytes=_vmem_limit(work)),
    )(pq, kv, cov)
    return ctx, attn


# ----------------------------- Module glue ---------------------------------
def init_params(key, d_model, enc_len):
    """PyTorch nn.Linear init U(-1/sqrt(in), 1/sqrt(in)); weights stored pre-transposed (in, out)."""
    def linear(k, out_f, in_f):
        k1, k2 = jax.random.split(k)
        bound = 1.0 / math.sqrt(in_f)
        w = jax.random.uniform(k1, (out_f, in_f), jnp.float32, -bound, bound)
        b = jax.random.uniform(k2, (out_f,), jnp.float32, -bound, bound)
        return w.T, b   # (in, out): no per-forward HBM transpose

    ks = jax.random.split(key, 5)
    return {
        "query": linear(ks[0], d_model, d_model),
        "key":   linear(ks[1], d_model, d_model),
        "val":   linear(ks[2], d_model, d_model),
        "out":   linear(ks[3], d_model, d_model),
        "cov":   linear(ks[4], enc_len, enc_len),
    }


def attention_with_coverage(params, querys, encoder_states, coverage_vectors,
                            nheads, *, mxu_dtype=None):
    B, Lq, D = querys.shape
    Lk = encoder_states.shape[1]
    d_k = D // nheads
    inv_sqrt_dk = 1.0 / math.sqrt(d_k)

    # Coverage projection with 1/sqrt(d_k) folded in: scores = (QK^T + cov)/sqrt(dk).
    cov = pallas_linear(coverage_vectors.reshape(B * Lq, Lk), *params["cov"],
                        scale=inv_sqrt_dk, mxu_dtype=mxu_dtype).reshape(B, Lq, Lk)

    # Q projection (scale folded in); stays in (B, Lq, H, d_k) layout -> no HBM transpose.
    pq = pallas_linear(querys.reshape(B * Lq, D), *params["query"],
                       scale=inv_sqrt_dk, mxu_dtype=mxu_dtype
                       ).reshape(B, Lq, nheads, d_k)

    # Fused K|V projection: encoder_states read once, one kernel launch, packed (B, Lk, 2H, dk).
    w_kv = jnp.concatenate([params["key"][0], params["val"][0]], axis=1)   # (D, 2D)
    b_kv = jnp.concatenate([params["key"][1], params["val"][1]], axis=0)   # (2D,)
    kv = pallas_linear(encoder_states.reshape(B * Lk, D), w_kv, b_kv,
                       mxu_dtype=mxu_dtype).reshape(B, Lk, 2 * nheads, d_k)

    ctx, attn = pallas_attention(pq, kv, cov, mxu_dtype=mxu_dtype)         # ctx: (B, Lq, D)

    out = pallas_linear(ctx.reshape(B * Lq, D), *params["out"],
                        mxu_dtype=mxu_dtype).reshape(B, Lq, D)
    return out, attn


# ----------------------------- Pure-JAX reference ---------------------------
def reference(params, querys, encoder_states, coverage_vectors, nheads):
    B, Lq, D = querys.shape
    Lk = encoder_states.shape[1]
    d_k = D // nheads

    def lin(x, wb):
        w_t, b = wb
        return x @ w_t + b

    cov = lin(coverage_vectors, params["cov"])
    pq = lin(querys, params["query"]).reshape(B, Lq, nheads, d_k).transpose(0, 2, 1, 3)
    pk = lin(encoder_states, params["key"]).reshape(B, Lk, nheads, d_k).transpose(0, 2, 1, 3)
    pv = lin(encoder_states, params["val"]).reshape(B, Lk, nheads, d_k).transpose(0, 2, 1, 3)

    scores = (jnp.einsum("bhqd,bhkd->bhqk", pq, pk) + cov[:, None]) / math.sqrt(d_k)
    attn = jax.nn.softmax(scores, axis=-1)
    ctx = jnp.einsum("bhqk,bhkd->bhqd", attn, pv)
    ctx = ctx.transpose(0, 2, 1, 3).reshape(B, Lq, D)
    return lin(ctx, params["out"]), attn


if __name__ == "__main__":
    B, Lq, d_model, nheads, enc_len = 2, 8, 32, 2, 8

    key = jax.random.PRNGKey(0)
    k_par, k_q, k_enc, k_cov = jax.random.split(key, 4)
    params = init_params(k_par, d_model, enc_len)

    querys = jax.random.normal(k_q, (B, Lq, d_model), jnp.float32)
    encoder_states = jax.random.normal(k_enc, (B, enc_len, d_model), jnp.float32)
    coverage_vectors = jax.random.normal(k_cov, (B, Lq, enc_len), jnp.float32)

    out, attn = attention_with_coverage(params, querys, encoder_states,
                                        coverage_vectors, nheads)
    jax.block_until_ready((out, attn))

    ref_out, ref_attn = reference(params, querys, encoder_states,
                                  coverage_vectors, nheads)
    assert out.shape == (B, Lq, d_model)
    assert attn.shape == (B, nheads, Lq, enc_len)
    # Tolerances account for pl.reciprocal(approx=True) in the softmax normalization.
    assert jnp.allclose(out, ref_out, atol=2e-3, rtol=2e-3), \
        float(jnp.max(jnp.abs(out - ref_out)))
    assert jnp.allclose(attn, ref_attn, atol=2e-3, rtol=2e-3), \
        float(jnp.max(jnp.abs(attn - ref_attn)))

    print("KERNEL_OK")
</pallas_src>

<mosaic_0001>
module attributes {stable_mosaic.version = 11 : i64} {
  func.func @_linear_kernel(%arg0: i32, %arg1: i32, %arg2: i32, %arg3: memref<16x8xf32, #tpu.memory_space<vmem>>, %arg4: memref<8x8xf32, #tpu.memory_space<vmem>>, %arg5: memref<1x8xf32, #tpu.memory_space<vmem>>, %arg6: memref<16x8xf32, #tpu.memory_space<vmem>>, %arg7: memref<16x8xf32, #tpu.memory_space<vmem>>) attributes {dimension_semantics = [#tpu.dimension_semantics<parallel>, #tpu.dimension_semantics<parallel>, #tpu.dimension_semantics<arbitrary>], iteration_bounds = array<i64: 1, 1, 1>, scalar_prefetch = 0 : i64, scratch_operands = 1 : i64, tpu.core_type = #tpu.core_type<tc>, window_params = [{transform_indices = @transform_0, window_bounds = array<i64: 16, 8>}, {transform_indices = @transform_1, window_bounds = array<i64: 8, 8>}, {transform_indices = @transform_2, window_bounds = array<i64: 1, 8>}, {transform_indices = @transform_3, window_bounds = array<i64: 16, 8>}]} {
    %c0_i32 = arith.constant 0 : i32
    %0 = arith.cmpi eq, %arg2, %c0_i32 : i32
    %1 = arith.extui %0 : i1 to i32
    %c0_i32_0 = arith.constant 0 : i32
    %2 = arith.cmpi ne, %1, %c0_i32_0 : i32
    scf.if %2 {
      %cst_10 = arith.constant 0.000000e+00 : f32
      %12 = vector.broadcast %cst_10 : f32 to vector<16x8xf32>
      %c0_11 = arith.constant 0 : index
      %c0_12 = arith.constant 0 : index
      %13 = vector.load %arg7[%c0_11, %c0_12] : memref<16x8xf32, #tpu.memory_space<vmem>>, vector<16x8xf32>
      tpu.vector_store %arg7[%c0_11, %c0_12], %12 {strides = array<i32>} : memref<16x8xf32, #tpu.memory_space<vmem>>, vector<16x8xf32>,
    } else {
    }
    %c0 = arith.constant 0 : index
    %c0_1 = arith.constant 0 : index
    %3 = vector.load %arg3[%c0, %c0_1] : memref<16x8xf32, #tpu.memory_space<vmem>>, vector<16x8xf32>
    %c0_2 = arith.constant 0 : index
    %c0_3 = arith.constant 0 : index
    %4 = vector.load %arg4[%c0_2, %c0_3] : memref<8x8xf32, #tpu.memory_space<vmem>>, vector<8x8xf32>
    %c0_4 = arith.constant 0 : index
    %c0_5 = arith.constant 0 : index
    %5 = vector.load %arg7[%c0_4, %c0_5] : memref<16x8xf32, #tpu.memory_space<vmem>>, vector<16x8xf32>
    %cst = arith.constant dense<0.000000e+00> : vector<16x8xf32>
    %6 = tpu.matmul %3, %4, %cst {dimension_numbers = #tpu.dot_dimension_numbers<[1], [0], [0], [1], [0, 0, 1, 1], [], []>} : vector<16x8xf32>, vector<8x8xf32>, vector<16x8xf32> -> vector<16x8xf32>
    %7 = arith.addf %5, %6 : vector<16x8xf32>
    %c0_6 = arith.constant 0 : index
    %c0_7 = arith.constant 0 : index
    %8 = vector.load %arg7[%c0_6, %c0_7] : memref<16x8xf32, #tpu.memory_space<vmem>>, vector<16x8xf32>
    tpu.vector_store %arg7[%c0_6, %c0_7], %7 {strides = array<i32>} : memref<16x8xf32, #tpu.memory_space<vmem>>, vector<16x8xf32>,
    %c0_i32_8 = arith.constant 0 : i32
    %9 = arith.cmpi eq, %arg2, %c0_i32_8 : i32
    %10 = arith.extui %9 : i1 to i32
    %c0_i32_9 = arith.constant 0 : i32
    %11 = arith.cmpi ne, %10, %c0_i32_9 : i32
    scf.if %11 {
      %c0_10 = arith.constant 0 : index
      %c0_11 = arith.constant 0 : index
      %12 = vector.load %arg7[%c0_10, %c0_11] : memref<16x8xf32, #tpu.memory_space<vmem>>, vector<16x8xf32>
      %c0_12 = arith.constant 0 : index
      %c0_13 = arith.constant 0 : index
      %13 = vector.load %arg5[%c0_12, %c0_13] : memref<1x8xf32, #tpu.memory_space<vmem>>, vector<1x8xf32>
      %14 = vector.broadcast %13 : vector<1x8xf32> to vector<16x8xf32>
      %15 = arith.addf %12, %14 : vector<16x8xf32>
      %cst_14 = arith.constant 2.500000e-01 : f32
      %16 = vector.broadcast %cst_14 : f32 to vector<16x8xf32>
      %17 = arith.mulf %15, %16 : vector<16x8xf32>
      %c0_15 = arith.constant 0 : index
      %c0_16 = arith.constant 0 : index
      %18 = vector.load %arg6[%c0_15, %c0_16] : memref<16x8xf32, #tpu.memory_space<vmem>>, vector<16x8xf32>
      tpu.vector_store %arg6[%c0_15, %c0_16], %17 {strides = array<i32>} : memref<16x8xf32, #tpu.memory_space<vmem>>, vector<16x8xf32>,
    } else {
    }
    return
  }
  func.func @transform_0(%arg0: i32, %arg1: i32, %arg2: i32) -> (i32, i32) {
    %c0_i32 = arith.constant 0 : i32
    return %arg0, %arg2 : i32, i32
  }
  func.func @transform_1(%arg0: i32, %arg1: i32, %arg2: i32) -> (i32, i32) {
    %c0_i32 = arith.constant 0 : i32
    return %arg2, %arg1 : i32, i32
  }
  func.func @transform_2(%arg0: i32, %arg1: i32, %arg2: i32) -> (i32, i32) {
    %c0_i32 = arith.constant 0 : i32
    %c0_i32_0 = arith.constant 0 : i32
    return %c0_i32, %arg1 : i32, i32
  }
  func.func @transform_3(%arg0: i32, %arg1: i32, %arg2: i32) -> (i32, i32) {
    %c0_i32 = arith.constant 0 : i32
    return %arg0, %arg1 : i32, i32
  }
}

</mosaic_0001>

<llo_original>
// kernel: tpu_custom_call.1
$region0: #{tpu_custom_call.1}
  #allocation0 [shape = 'u32[]', space=smem, size = 0x4, offset = 0x4, fixed_abs, tag = 'smem constant byte address 0x4 - core index']
  #allocation1 [shape = 'u32[144,128]{1,0:T(1,128)}', space=vmem, size = 0x12000, scoped, tag = 'internal scratch']
  #allocation2 [shape = 'f32[16,8]{1,0:T(8,128)}', space=vmem, size = 0x2000, scoped, tag = 'scratch operand']
  %s0 = inlined_call_operand.vmem [shape: f32[16,8], index: 0, kind: input, shape index: {}]
  %s1 = inlined_call_operand.vmem [shape: f32[8,8], index: 1, kind: input, shape index: {}]
  %s2 = inlined_call_operand.vmem [shape: f32[1,8], index: 2, kind: input, shape index: {}]
  %s3 = inlined_call_operand.vmem [shape: f32[16,8], index: 3, kind: output, shape index: {}]
  %s4 = sld [smem:[#allocation0]]
  $region30: #{tpu_custom_call.1} parent=0
    _
  %s6 = ssub.s32 1, %s4
  %s7 = scalar_select 0, %s6, %s4
  // Predicated region
  $region2: #{tpu_custom_call.1} parent=0 // pred_check
    _
  $region3: #{tpu_custom_call.1} parent=0 // pred_check_branch
    %9 = sbr.rel (0) target = $region5
  $region4: #{tpu_custom_call.1} parent=0 // pred_region
    _
  $region5: #{tpu_custom_call.1} parent=0 // pred_fallthru
    _
  // Predicated region
  $region6: #{tpu_custom_call.1} parent=0 // pred_check
    _
  $region7: #{tpu_custom_call.1} parent=0 // pred_check_branch
    %11 = sbr.rel (0) target = $region9
  $region8: #{tpu_custom_call.1} parent=0 // pred_region
    _
  $region9: #{tpu_custom_call.1} parent=0 // pred_fallthru
    _
  // Predicated region
  $region10: #{tpu_custom_call.1} parent=0 // pred_check
    _
  $region11: #{tpu_custom_call.1} parent=0 // pred_check_branch
    %13 = sbr.rel (0) target = $region13
  $region12: #{tpu_custom_call.1} parent=0 // pred_region
    _
  $region13: #{tpu_custom_call.1} parent=0 // pred_fallthru
    _
  %p14 = scmp.eq.s32.totalorder 0, 0
  // Predicated region
  $region14: #{tpu_custom_call.1} parent=0 // pred_check
    %p15 = pneg %p14
  $region15: #{tpu_custom_call.1} parent=0 // pred_check_branch
    %17 = sbr.rel (%p15) target = $region17
  $region16: #{tpu_custom_call.1} parent=0 // pred_region
    %vm18 = vcmask 64512
    %19 = vst.msk [vmem:[#allocation2] sm:$0xff] %vm18, 0.0
    %20 = vst.msk [vmem:[#allocation2 + $0x8] sm:$0xff] %vm18, 0.0
  $region17: #{tpu_custom_call.1} parent=0 // pred_fallthru
    _
  %v21 = vld [vmem:[%s0] sm:$0xff]
  %v22 = vld [vmem:[%s0 + $0x8] sm:$0xff]
  %v23 = vld [vmem:[%s1] sm:$0xff]
  %v24 = vld [vmem:[#allocation2] sm:$0xff]
  %v25 = vld [vmem:[#allocation2 + $0x8] sm:$0xff]
  %vm26 = vcmask 64512
  %v28 = vsel %vm26, %v21, 0
  %v31 = vsel %vm26, %v22, 0
  %33 = vmatprep.subr.mxu0 0.0
  %34 = vmatpush1.msra.mxu0 0.0
  %35 = vmatprep.subr.mxu0 0.0
  %36 = vmatpush1.msra.mxu0 0.0
  %37 = vmatprep.subr.mxu0 0.0
  %38 = vmatpush1.msra.mxu0 0.0
  %39 = vmatprep.subr.mxu0 0.0
  %40 = vmatpush1.msra.mxu0 0.0
  %41 = vmatprep.subr.mxu0 0.0
  %42 = vmatpush1.msra.mxu0 0.0
  %43 = vmatprep.subr.mxu0 0.0
  %44 = vmatpush1.msra.mxu0 0.0
  %45 = vmatprep.subr.mxu0 0.0
  %46 = vmatpush1.msra.mxu0 0.0
  %47 = vmatprep.subr.mxu0 0.0
  %48 = vmatpush1.msra.mxu0 0.0
  %49 = vmatprep.subr.mxu0 0.0
  %50 = vmatpush1.msra.mxu0 0.0
  %51 = vmatprep.subr.mxu0 0.0
  %52 = vmatpush1.msra.mxu0 0.0
  %53 = vmatprep.subr.mxu0 0.0
  %54 = vmatpush1.msra.mxu0 0.0
  %55 = vmatprep.subr.mxu0 0.0
  %56 = vmatpush1.msra.mxu0 0.0
  %57 = vmatprep.subr.mxu0 0.0
  %58 = vmatpush1.msra.mxu0 0.0
  %59 = vmatprep.subr.mxu0 0.0
  %60 = vmatpush1.msra.mxu0 0.0
  %61 = vmatprep.subr.mxu0 0.0
  %62 = vmatpush1.msra.mxu0 0.0
  %63 = vmatprep.subr.mxu0 0.0
  %64 = vmatpush1.msra.mxu0 %v23
  %65 = vmatprep.subr.mxu0 0.0
  %66 = vmatpush2.msra.mxu0 0.0
  %67 = vmatprep.subr.mxu0 0.0
  %68 = vmatpush2.msra.mxu0 0.0
  %69 = vmatprep.subr.mxu0 0.0
  %70 = vmatpush2.msra.mxu0 0.0
  %71 = vmatprep.subr.mxu0 0.0
  %72 = vmatpush2.msra.mxu0 0.0
  %73 = vmatprep.subr.mxu0 0.0
  %74 = vmatpush2.msra.mxu0 0.0
  %75 = vmatprep.subr.mxu0 0.0
  %76 = vmatpush2.msra.mxu0 0.0
  %77 = vmatprep.subr.mxu0 0.0
  %78 = vmatpush2.msra.mxu0 0.0
  %79 = vmatprep.subr.mxu0 0.0
  %80 = vmatpush2.msra.mxu0 0.0
  %81 = vmatprep.subr.mxu0 0.0
  %82 = vmatpush2.msra.mxu0 0.0
  %83 = vmatprep.subr.mxu0 0.0
  %84 = vmatpush2.msra.mxu0 0.0
  %85 = vmatprep.subr.mxu0 0.0
  %86 = vmatpush2.msra.mxu0 0.0
  %87 = vmatprep.subr.mxu0 0.0
  %88 = vmatpush2.msra.mxu0 0.0
  %89 = vmatprep.subr.mxu0 0.0
  %90 = vmatpush2.msra.mxu0 0.0
  %91 = vmatprep.subr.mxu0 0.0
  %92 = vmatpush2.msra.mxu0 0.0
  %93 = vmatprep.subr.mxu0 0.0
  %94 = vmatpush2.msra.mxu0 0.0
  %95 = vmatprep.subr.mxu0 0.0
  %96 = vmatpush2.msra.mxu0 0.0
  %97 = vmatprep.mubr.f32.mxu0 0.0
  %98 = vmatmul.mubr.f32.gmra.mxu0 %v28
  %v99 = vpop.f32.mrf.mxu0
  %v100 = vadd.f32 0.0, %v99
  %v101 = vpop.f32.mrf.mxu0
  %102 = vmatprep.mubr.f32.mxu0 0.0
  %103 = vmatmul.mubr.f32.gmra.mxu0 %v31
  %v104 = vpop.f32.mrf.mxu0
  %v105 = vadd.f32 0.0, %v104
  %v106 = vpop.f32.mrf.mxu0
  %107 = vdwg.mxu0
  %v108 = vadd.f32 %v24, %v100
  %v109 = vadd.f32 %v25, %v105
  %110 = vst.msk [vmem:[#allocation2] sm:$0xff] %vm26, %v108
  %111 = vst.msk [vmem:[#allocation2 + $0x8] sm:$0xff] %vm26, %v109
  // Predicated region
  $region18: #{tpu_custom_call.1} parent=0 // pred_check
    %p112 = pneg %p14
  $region19: #{tpu_custom_call.1} parent=0 // pred_check_branch
    %114 = sbr.rel (%p112) target = $region21
  $region20: #{tpu_custom_call.1} parent=0 // pred_region
    %v115 = vld [vmem:[#allocation2] sm:$0xff]
    %v116 = vld [vmem:[#allocation2 + $0x8] sm:$0xff]
    %v117 = vld [vmem:[%s2] sm:$0x1]
    %v119 = vlaneseq
    %v120 = vshrl.u32 %v119, 7
    %v121 = vsub.s32 0, %v120
    %v122 = vrot.slane %v117, %v121
    %v124 = vadd.f32 %v115, %v122
    %v125 = vadd.f32 %v116, %v122
    %v126 = vmul.f32 %v124, 0.25
    %v127 = vmul.f32 %v125, 0.25
    %128 = vst.msk [vmem:[%s3] sm:$0xff] %vm26, %v126
    %129 = vst.msk [vmem:[%s3 + $0x8] sm:$0xff] %vm26, %v127
  $region21: #{tpu_custom_call.1} parent=0 // pred_fallthru
    _
  // Predicated region
  $region22: #{tpu_custom_call.1} parent=0 // pred_check
    _
  $region23: #{tpu_custom_call.1} parent=0 // pred_check_branch
    %131 = sbr.rel (0) target = $region25
  $region24: #{tpu_custom_call.1} parent=0 // pred_region
    _
  $region25: #{tpu_custom_call.1} parent=0 // pred_fallthru
    _
  // Predicated region
  $region26: #{tpu_custom_call.1} parent=0 // pred_check
    _
  $region27: #{tpu_custom_call.1} parent=0 // pred_check_branch
    %133 = sbr.rel (0) target = $region29
  $region28: #{tpu_custom_call.1} parent=0 // pred_region
    _
  $region29: #{tpu_custom_call.1} parent=0 // pred_fallthru
    _

</llo_original>
